<compile_context>
chip_gen: v5e
topology: v5e:2x2
jax: 0.10.0
libtpu: 0.0.40
codegen_flags: <defaults>
</compile_context>

<pallas_src>
import jax
import jax.numpy as jnp
from jax.experimental import pallas as pl
from jax.experimental.pallas import tpu as pltpu


_TARGET_BLOCK_BYTES = 4 * 1024 * 1024   # ~4 MiB blocks: amortize per-step overhead
_VMEM_LIMIT_BYTES = 32 * 1024 * 1024    # 2x(in+out) ~4 MiB buffers + slack, safe on v5e/v6e/v7x


def _sublane_multiple(dtype) -> int:
    itemsize = jnp.dtype(dtype).itemsize
    return {4: 8, 2: 16, 1: 32}.get(itemsize, 8)


def _round_up(x: int, m: int) -> int:
    return ((x + m - 1) // m) * m


def _drop_path_kernel(x_ref, scale_ref, o_ref):
    # x_ref     : VMEM (TB, TF) block of the flattened (N, feat) input
    # scale_ref : VMEM (TB, 1) f32 = floor(keep_prob + u) / keep_prob per sample
    # o_ref     : VMEM (TB, TF) output block
    x = x_ref[...].astype(jnp.float32)
    o_ref[...] = (x * scale_ref[...]).astype(o_ref.dtype)


def drop_path(x, drop_prob: float, *, training: bool = True, key=None):
    """Pallas implementation of DropPath.forward (per-sample stochastic depth).

    Always returns an array with the same shape/dtype as `x`.
    """
    if drop_prob == 0.0 or not training:
        return x  # identity path, exactly as in the PyTorch module

    assert key is not None, "need a PRNG key when drop_prob > 0 and training"
    keep_prob = 1.0 - drop_prob

    n = x.shape[0]
    feat = 1
    for d in x.shape[1:]:
        feat *= d
    flat = x.reshape(n, feat)  # metadata-only reshape (row-major collapse)

    # Per-sample scale: floor(keep_prob + U[0,1)) / keep_prob -> 0 or 1/keep_prob.
    # Tiny (N,1) RNG + math stays in JAX glue; the element-wise hot path is the kernel.
    u = jax.random.uniform(key, (n, 1), dtype=jnp.float32)
    scale = jnp.floor(keep_prob + u) * (1.0 / keep_prob)

    itemsize = jnp.dtype(x.dtype).itemsize
    sub = _sublane_multiple(x.dtype)
    row_bytes = feat * itemsize
    tb_min = n if n <= sub else sub  # smallest batch-block satisfying the sublane rule

    if tb_min * row_bytes > _TARGET_BLOCK_BYTES:
        # Even a minimal group of full rows exceeds the target: tile the feature axis.
        tb = tb_min
        cap = max(128, (_TARGET_BLOCK_BYTES // (tb * itemsize)) // 128 * 128)
        n_f_blocks = pl.cdiv(feat, cap)
        # Balance block sizes so the ragged last block wastes <128 lanes of DMA.
        tf = _round_up(pl.cdiv(feat, n_f_blocks), 128)
    else:
        # Full feature rows per block; batch samples up to ~the target block size.
        tf = feat  # full extent -> exempt from the 128-lane rule even if unaligned
        rows = _TARGET_BLOCK_BYTES // max(row_bytes, 1)
        if rows >= n:
            tb = n
        else:
            tb = max(tb_min, (rows // sub) * sub)

    grid = (pl.cdiv(n, tb), pl.cdiv(feat, tf))

    out = pl.pallas_call(
        _drop_path_kernel,
        out_shape=jax.ShapeDtypeStruct((n, feat), x.dtype),
        grid=grid,
        in_specs=[
            pl.BlockSpec((tb, tf), lambda i, j: (i, j)),
            pl.BlockSpec((tb, 1), lambda i, j: (i, 0)),
        ],
        out_specs=pl.BlockSpec((tb, tf), lambda i, j: (i, j)),
        compiler_params=pltpu.CompilerParams(
            dimension_semantics=("parallel", "parallel"),
            vmem_limit_bytes=_VMEM_LIMIT_BYTES,
        ),
    )(flat, scale)

    return out.reshape(x.shape)


if __name__ == "__main__":
    key = jax.random.PRNGKey(0)
    k_x, k_mask = jax.random.split(key)

    drop_prob = 0.3
    keep_prob = 1.0 - drop_prob

    # ---- NCHW f32 input (128-aligned feature count), training mode -------------
    x = jax.random.normal(k_x, (2, 4, 16, 16), dtype=jnp.float32)
    out = jax.block_until_ready(drop_path(x, drop_prob, training=True, key=k_mask))

    u = jax.random.uniform(k_mask, (x.shape[0], 1), dtype=jnp.float32)
    mask = jnp.floor(keep_prob + u)                                  # 0.0 or 1.0 per sample
    ref = (x / keep_prob) * mask.reshape(2, 1, 1, 1).astype(x.dtype)
    assert out.shape == x.shape and out.dtype == x.dtype
    assert jnp.allclose(out, ref, atol=1e-6, rtol=1e-5)

    # ---- non-128-aligned feature count (exercises the ragged/masked path) ------
    x_odd = jax.random.normal(k_x, (2, 3, 5, 7), dtype=jnp.float32)
    out_odd = jax.block_until_ready(drop_path(x_odd, drop_prob, training=True, key=k_mask))
    ref_odd = (x_odd / keep_prob) * mask.reshape(2, 1, 1, 1).astype(x_odd.dtype)
    assert jnp.allclose(out_odd, ref_odd, atol=1e-6, rtol=1e-5)

    # ---- bf16 input (dtype-aware sublane rounding + f32 compute path) ----------
    x_bf = jax.random.normal(k_x, (4, 8, 16, 16), dtype=jnp.bfloat16)
    out_bf = jax.block_until_ready(drop_path(x_bf, drop_prob, training=True, key=k_mask))
    u4 = jax.random.uniform(k_mask, (4, 1), dtype=jnp.float32)
    scale4 = jnp.floor(keep_prob + u4) * (1.0 / keep_prob)
    ref_bf = (x_bf.astype(jnp.float32) * scale4.reshape(4, 1, 1, 1)).astype(jnp.bfloat16)
    assert out_bf.dtype == jnp.bfloat16
    assert jnp.allclose(out_bf.astype(jnp.float32), ref_bf.astype(jnp.float32),
                        atol=1e-2, rtol=1e-2)

    # ---- eval-mode / drop_prob == 0 paths are identity --------------------------
    ident = drop_path(x, 0.0, training=True, key=k_mask)
    assert jnp.array_equal(ident, x)
    ident2 = drop_path(x, drop_prob, training=False, key=k_mask)
    assert jnp.array_equal(ident2, x)

    print("KERNEL_OK")
</pallas_src>

<mosaic_0001>
module attributes {stable_mosaic.version = 11 : i64} {
  func.func @_drop_path_kernel(%arg0: i32, %arg1: i32, %arg2: memref<2x1024xf32, #tpu.memory_space<vmem>>, %arg3: memref<2x1xf32, #tpu.memory_space<vmem>>, %arg4: memref<2x1024xf32, #tpu.memory_space<vmem>>) attributes {dimension_semantics = [#tpu.dimension_semantics<parallel>, #tpu.dimension_semantics<parallel>], iteration_bounds = array<i64: 1, 1>, scalar_prefetch = 0 : i64, scratch_operands = 0 : i64, tpu.core_type = #tpu.core_type<tc>, window_params = [{transform_indices = @transform_0, window_bounds = array<i64: 2, 1024>}, {transform_indices = @transform_1, window_bounds = array<i64: 2, 1>}, {transform_indices = @transform_2, window_bounds = array<i64: 2, 1024>}]} {
    %c0 = arith.constant 0 : index
    %c0_0 = arith.constant 0 : index
    %0 = vector.load %arg2[%c0, %c0_0] : memref<2x1024xf32, #tpu.memory_space<vmem>>, vector<2x1024xf32>
    %c0_1 = arith.constant 0 : index
    %c0_2 = arith.constant 0 : index
    %1 = vector.load %arg3[%c0_1, %c0_2] : memref<2x1xf32, #tpu.memory_space<vmem>>, vector<2x1xf32>
    %2 = vector.broadcast %1 : vector<2x1xf32> to vector<2x1024xf32>
    %3 = arith.mulf %0, %2 : vector<2x1024xf32>
    %c0_3 = arith.constant 0 : index
    %c0_4 = arith.constant 0 : index
    %4 = vector.load %arg4[%c0_3, %c0_4] : memref<2x1024xf32, #tpu.memory_space<vmem>>, vector<2x1024xf32>
    tpu.vector_store %arg4[%c0_3, %c0_4], %3 {strides = array<i32>} : memref<2x1024xf32, #tpu.memory_space<vmem>>, vector<2x1024xf32>,
    return
  }
  func.func @transform_0(%arg0: i32, %arg1: i32) -> (i32, i32) {
    %c0_i32 = arith.constant 0 : i32
    return %arg0, %arg1 : i32, i32
  }
  func.func @transform_1(%arg0: i32, %arg1: i32) -> (i32, i32) {
    %c0_i32 = arith.constant 0 : i32
    %c0_i32_0 = arith.constant 0 : i32
    return %arg0, %c0_i32 : i32, i32
  }
  func.func @transform_2(%arg0: i32, %arg1: i32) -> (i32, i32) {
    %c0_i32 = arith.constant 0 : i32
    return %arg0, %arg1 : i32, i32
  }
}

</mosaic_0001>

<llo_original>
// kernel: tpu_custom_call.1
$region0: #{tpu_custom_call.1}
  #allocation0 [shape = 'u32[]', space=smem, size = 0x4, offset = 0x4, fixed_abs, tag = 'smem constant byte address 0x4 - core index']
  #allocation1 [shape = 'u32[72,128]{1,0:T(1,128)}', space=vmem, size = 0x9000, scoped, tag = 'internal scratch']
  %s0 = inlined_call_operand.hbm [shape: f32[2,1024], index: 0, kind: input, shape index: {}]
  %s1 = inlined_call_operand.vmem [shape: f32[2,1], index: 1, kind: input, shape index: {}]
  %s2 = inlined_call_operand.hbm [shape: f32[2,1024], index: 2, kind: output, shape index: {}]
  %s3 = sld [smem:[#allocation0]]
  $region22: #{tpu_custom_call.1} parent=0
    _
  %s5 = ssub.s32 1, %s3
  %s6 = scalar_select 0, %s5, %s3
  $region1: #{tpu_custom_call.1} parent=0
    #allocation2 [shape = 'u8[8192]{0}', space=vmem, size = 0x2000, scoped, tag = 'input window, operand 0, single buffered']
    #allocation3 [shape = 's32[1]{0}', space=sflag, size = 0x4, scoped, tag = 'scoped memory for tpu_custom_call.1']
    #allocation4 [shape = 's32[1]{0}', space=sflag, size = 0x4, scoped, tag = 'scoped memory for tpu_custom_call.1']
    #allocation5 [shape = 'u8[8192]{0}', space=vmem, size = 0x2000, scoped, tag = 'output window, operand 0, single buffered']
    %7 = vsyncpa [#allocation3], 0
    %8 = vsyncpa [#allocation4], 0
    // Predicated region
    $region2: #{tpu_custom_call.1} parent=1 // pred_check
      _
    $region3: #{tpu_custom_call.1} parent=1 // pred_check_branch
      %10 = sbr.rel (0) target = $region5
    $region4: #{tpu_custom_call.1} parent=1 // pred_region
      %12 = vsyncadd [#allocation3], 0
      %s14 = sshll.u32 %s0, 4
      %s15 = int_to_ptr.hbm [resolvable:$true] %s14
      %s16 = sshll.u32 [#allocation2], 4
      %s17 = int_to_ptr.vmem [resolvable:$true] %s16
      %19 = dma.hbm_to_vmem [thread:$0]  %s15, 256, %s17, [#allocation3]
    $region5: #{tpu_custom_call.1} parent=1 // pred_fallthru
      _
    // Predicated region
    $region6: #{tpu_custom_call.1} parent=1 // pred_check
      _
    $region7: #{tpu_custom_call.1} parent=1 // pred_check_branch
      %21 = sbr.rel (0) target = $region9
    $region8: #{tpu_custom_call.1} parent=1 // pred_region
      _
    $region9: #{tpu_custom_call.1} parent=1 // pred_fallthru
      _
    // Predicated region
    $region10: #{tpu_custom_call.1} parent=1 // pred_check
      _
    $region11: #{tpu_custom_call.1} parent=1 // pred_check_branch
      %23 = sbr.rel (0) target = $region13
    $region12: #{tpu_custom_call.1} parent=1 // pred_region
      %25 = dma.done [#allocation3], 256
    $region13: #{tpu_custom_call.1} parent=1 // pred_fallthru
      _
    %v26 = vld [vmem:[#allocation2] sm:$0xff]
    %v27 = vld [vmem:[#allocation2 + $0x8] sm:$0xff]
    %v28 = vld [vmem:[%s1] sm:$0x3]
    %30 = vset.pattern.permute.xlu0 0
    %31 = vperm.xlu0 %30, %v28
    %v32 = vpop.permute.xlu0 %31
    %v34 = vunpack.c.l.s4 269488144
    %v35 = vunpack.c.0.s8 %v34
    %v36 = vperm.slane %v32, %v35
    %v38 = vmul.f32 %v26, %v36
    %v39 = vmul.f32 %v27, %v36
    %40 = vst [vmem:[#allocation5] sm:$0xff] %v38
    %41 = vst [vmem:[#allocation5 + $0x8] sm:$0xff] %v39
    // Predicated region
    $region14: #{tpu_custom_call.1} parent=1 // pred_check
      _
    $region15: #{tpu_custom_call.1} parent=1 // pred_check_branch
      %43 = sbr.rel (0) target = $region17
    $region16: #{tpu_custom_call.1} parent=1 // pred_region
      %45 = vsyncadd [#allocation4], 0
      %s47 = sshll.u32 [#allocation5], 4
      %s48 = int_to_ptr.vmem [resolvable:$true] %s47
      %s49 = sshll.u32 %s2, 4
      %s50 = int_to_ptr.hbm [resolvable:$true] %s49
      %52 = dma.vmem_to_hbm [thread:$0]  %s48, 256, %s50, [#allocation4]
    $region17: #{tpu_custom_call.1} parent=1 // pred_fallthru
      _
    // Predicated region
    $region18: #{tpu_custom_call.1} parent=1 // pred_check
      _
    $region19: #{tpu_custom_call.1} parent=1 // pred_check_branch
      %54 = sbr.rel (0) target = $region21
    $region20: #{tpu_custom_call.1} parent=1 // pred_region
      %56 = dma.done [#allocation4], 256
    $region21: #{tpu_custom_call.1} parent=1 // pred_fallthru
      _
    %57 = vsyncpa [#allocation3], 1
    %58 = vsyncpa [#allocation4], 1

</llo_original>
